<compile_context>
chip_gen: v7x
topology: tpu7x:2x2x1
jax: 0.10.0
libtpu: 0.0.40
codegen_flags: <defaults>
</compile_context>

<pallas_src>
import functools

import numpy as np

import jax
import jax.numpy as jnp
from jax.experimental import pallas as pl
from jax.experimental.pallas import tpu as pltpu


def _round_up(x: int, m: int) -> int:
    return ((x + m - 1) // m) * m


def _vmem_physical_bytes() -> int:
    # Generation-aware VMEM size (v5e/v6e: 128 MiB, v7x: 64 MiB per core).
    try:
        return int(pltpu.get_tpu_info().vmem_capacity_bytes)
    except Exception:
        return 64 * 1024 * 1024          # conservative fallback (v7x per-core)


# ----------------------------------------------------------------------------
# Path A: tiny vocab -> one-hot matmul on the MXU (table resident in VMEM).
# ----------------------------------------------------------------------------
def _onehot_kernel(ids_ref, emb_ref, out_ref, *, num_embeddings):
    # ids_ref: (T, 1) int32 tile of token ids.
    # emb_ref: full (V, D) table, constant block index -> resident in VMEM.
    ids = ids_ref[...]                                           # (T, 1)
    t = ids.shape[0]
    vocab_iota = jax.lax.broadcasted_iota(jnp.int32, (t, num_embeddings), 1)
    onehot = (ids == vocab_iota).astype(emb_ref.dtype)           # (T, V)
    # NOTE: for f32 tables the MXU matmul may round products through bf16
    # passes at default precision; bf16 tables are exact.
    acc = jnp.dot(onehot, emb_ref[...], preferred_element_type=jnp.float32)
    out_ref[...] = acc.astype(out_ref.dtype)


def _lookup_onehot(flat_ids, table, tokens_per_tile, n_tiles, vmem_limit):
    num_embeddings, emb_dim = table.shape
    n_pad = n_tiles * tokens_per_tile
    itemsize = jnp.dtype(table.dtype).itemsize
    # (n_pad, 1) ids column: lets the kernel broadcast ids along lanes without
    # any in-kernel transpose (minor HBM padding overhead, tiny-vocab path).
    ids2d = flat_ids.reshape(n_pad, 1)
    cost = pl.CostEstimate(
        flops=2 * n_pad * num_embeddings * emb_dim,
        transcendentals=0,
        bytes_accessed=(num_embeddings * emb_dim * itemsize
                        + n_pad * emb_dim * itemsize + n_pad * 4),
    )
    kernel = functools.partial(_onehot_kernel, num_embeddings=num_embeddings)
    return pl.pallas_call(
        kernel,
        out_shape=jax.ShapeDtypeStruct((n_pad, emb_dim), table.dtype),
        grid=(n_tiles,),
        in_specs=[
            pl.BlockSpec((tokens_per_tile, 1), lambda i: (i, 0)),
            pl.BlockSpec((num_embeddings, emb_dim), lambda i: (0, 0)),
        ],
        out_specs=pl.BlockSpec((tokens_per_tile, emb_dim), lambda i: (i, 0)),
        compiler_params=pltpu.CompilerParams(
            dimension_semantics=("parallel",),
            vmem_limit_bytes=vmem_limit,
        ),
        cost_estimate=cost,
    )(ids2d, table)


# ----------------------------------------------------------------------------
# Path B: table fits VMEM -> copy it once into a single-buffered scratch and
# gather rows in sublane groups (one dense store per group).
# ----------------------------------------------------------------------------
def _resident_gather_kernel(ids_ref, emb_hbm_ref, out_ref, table_vmem, copy_sem,
                            *, tokens_per_tile, group):
    # ids_ref:     SMEM scalar-prefetch ref with all (padded) token ids.
    # emb_hbm_ref: raw (V, D) table left in HBM (memory_space=pl.ANY).
    # table_vmem:  single-buffered (V, D) VMEM scratch holding the table.
    # Grid axis is "arbitrary" (sequential on one core) so the step-0 copy is
    # visible to every later step.
    @pl.when(pl.program_id(0) == 0)
    def _():
        cp = pltpu.make_async_copy(emb_hbm_ref, table_vmem, copy_sem.at[0])
        cp.start()
        cp.wait()

    base = pl.program_id(0) * tokens_per_tile
    n_groups = tokens_per_tile // group

    @pl.loop(0, n_groups)
    def _(g):
        start = pl.multiple_of(g * group, group)
        rows = [table_vmem[pl.ds(ids_ref[base + start + r], 1), :]
                for r in range(group)]
        # One packed, sublane-aligned dense store per group (not per row).
        out_ref[pl.ds(start, group), :] = jnp.concatenate(rows, axis=0)


def _lookup_resident(flat_ids, table, tokens_per_tile, n_tiles, group,
                     vmem_limit):
    num_embeddings, emb_dim = table.shape
    n_pad = n_tiles * tokens_per_tile
    itemsize = jnp.dtype(table.dtype).itemsize
    cost = pl.CostEstimate(
        flops=0,
        transcendentals=0,
        bytes_accessed=(num_embeddings * emb_dim * itemsize        # table read
                        + 2 * n_pad * emb_dim * itemsize + n_pad * 4),
    )
    kernel = functools.partial(_resident_gather_kernel,
                               tokens_per_tile=tokens_per_tile, group=group)
    return pl.pallas_call(
        kernel,
        out_shape=jax.ShapeDtypeStruct((n_pad, emb_dim), table.dtype),
        grid_spec=pltpu.PrefetchScalarGridSpec(
            num_scalar_prefetch=1,                       # flat_ids -> SMEM
            grid=(n_tiles,),
            in_specs=[pl.BlockSpec(memory_space=pl.ANY)],  # table stays in HBM
            out_specs=pl.BlockSpec((tokens_per_tile, emb_dim),
                                   lambda i, ids: (i, 0)),
            scratch_shapes=[
                pltpu.VMEM((num_embeddings, emb_dim), table.dtype),
                pltpu.SemaphoreType.DMA((1,)),
            ]),
        compiler_params=pltpu.CompilerParams(
            # Step-0 table init requires sequential grid execution on one core.
            dimension_semantics=("arbitrary",),
            vmem_limit_bytes=vmem_limit,
        ),
        cost_estimate=cost,
    )(flat_ids, table)


# ----------------------------------------------------------------------------
# Path C: table in HBM -> per-row gather DMAs with a rolling in-flight window.
# ----------------------------------------------------------------------------
def _hbm_gather_kernel(ids_ref, emb_hbm_ref, out_ref, sems,
                       *, tokens_per_tile, window):
    base = pl.program_id(0) * tokens_per_tile

    def start_row(t):
        row = ids_ref[base + t]
        pltpu.make_async_copy(
            emb_hbm_ref.at[pl.ds(row, 1), :],
            out_ref.at[pl.ds(t, 1), :],
            sems.at[t % window],
        ).start()

    def wait_row(t):
        pltpu.make_async_copy(
            emb_hbm_ref.at[pl.ds(0, 1), :],          # dummy src, same shape
            out_ref.at[pl.ds(t, 1), :],
            sems.at[t % window],
        ).wait()

    # Prime the window: `window` random-row reads in flight at once.
    @pl.loop(0, window)
    def _(t):
        start_row(t)

    # Steady state: retire row t, immediately issue row t + window.
    @pl.loop(0, tokens_per_tile)
    def _(t):
        wait_row(t)

        @pl.when(t + window < tokens_per_tile)
        def _():
            start_row(t + window)


def _lookup_hbm_gather(flat_ids, table, tokens_per_tile, n_tiles, vmem_limit):
    _, emb_dim = table.shape
    n_pad = n_tiles * tokens_per_tile
    itemsize = jnp.dtype(table.dtype).itemsize
    window = min(64, tokens_per_tile)
    cost = pl.CostEstimate(
        flops=0,
        transcendentals=0,
        bytes_accessed=2 * n_pad * emb_dim * itemsize + n_pad * 4,
    )
    kernel = functools.partial(_hbm_gather_kernel,
                               tokens_per_tile=tokens_per_tile, window=window)
    return pl.pallas_call(
        kernel,
        out_shape=jax.ShapeDtypeStruct((n_pad, emb_dim), table.dtype),
        grid_spec=pltpu.PrefetchScalarGridSpec(
            num_scalar_prefetch=1,                       # flat_ids -> SMEM
            grid=(n_tiles,),
            in_specs=[pl.BlockSpec(memory_space=pl.ANY)],  # table stays in HBM
            out_specs=pl.BlockSpec((tokens_per_tile, emb_dim),
                                   lambda i, ids: (i, 0)),
            scratch_shapes=[pltpu.SemaphoreType.DMA((window,))]),
        compiler_params=pltpu.CompilerParams(
            dimension_semantics=("parallel",),
            vmem_limit_bytes=vmem_limit,
        ),
        cost_estimate=cost,
    )(flat_ids, table)


# ----------------------------------------------------------------------------
# Public wrapper: Pallas equivalent of `embedding_matrix[token_ids]`.
# ----------------------------------------------------------------------------
_ONEHOT_MAX_TABLE_BYTES = 1 * 1024 * 1024    # ~V<=2K at D=128 f32
_RESIDENT_TRAFFIC_FACTOR = 4                 # table must be <= 4x gathered ...
_SMALL_TABLE_BYTES = 256 * 1024              # ... unless it is tiny anyway


def embedding_lookup(token_ids: jax.Array,
                     embedding_matrix: jax.Array,
                     *,
                     max_tokens_per_tile: int = 512,
                     force_path: str | None = None) -> jax.Array:
    orig_shape = token_ids.shape
    num_embeddings, emb_dim = embedding_matrix.shape
    itemsize = jnp.dtype(embedding_matrix.dtype).itemsize

    # TODO(synk): PyTorch raises on out-of-range ids; here they are clamped to
    # [0, V-1] (deterministic, and the HBM gather DMA can never bounds-fault).
    flat_ids = jnp.clip(token_ids.reshape(-1).astype(jnp.int32),
                        0, num_embeddings - 1)
    n_tokens = flat_ids.shape[0]

    # Sublane packing group: 8 rows (4-byte), 16 (2-byte), 32 (1-byte).
    group = 8 * max(1, 4 // itemsize)
    tokens_per_tile = min(_round_up(max_tokens_per_tile, group),
                          _round_up(n_tokens, group))

    # Pad flattened ids to a whole number of tiles (id 0 is always valid);
    # padded rows are sliced away afterwards.
    n_pad = _round_up(n_tokens, tokens_per_tile)
    if n_pad != n_tokens:
        flat_ids = jnp.concatenate(
            [flat_ids, jnp.zeros((n_pad - n_tokens,), jnp.int32)])
    n_tiles = n_pad // tokens_per_tile

    # Generation-aware VMEM budget.
    vmem_phys = _vmem_physical_bytes()
    vmem_limit = max(min(vmem_phys - 16 * 1024 * 1024, 110 * 1024 * 1024),
                     32 * 1024 * 1024)
    table_bytes = num_embeddings * emb_dim * itemsize
    tile_bytes = tokens_per_tile * emb_dim * itemsize
    # Single-buffered table scratch + double-buffered output tile + margin.
    fits_resident = (table_bytes + 2 * tile_bytes + 4 * 1024 * 1024
                     <= vmem_limit - 8 * 1024 * 1024)

    # Traffic-based choice: a resident table re-streams all of it HBM->VMEM on
    # every call, so only do that when the gathered bytes justify it (decode-
    # sized lookups of big tables go to the per-row DMA path instead).
    gathered_bytes = n_tokens * emb_dim * itemsize
    resident_pays = (table_bytes <= _RESIDENT_TRAFFIC_FACTOR * gathered_bytes
                     or table_bytes <= _SMALL_TABLE_BYTES)

    path = force_path
    if path is None:
        if table_bytes <= _ONEHOT_MAX_TABLE_BYTES and resident_pays:
            path = "onehot"
        elif fits_resident and resident_pays:
            path = "resident"
        else:
            path = "hbm"

    if path == "onehot":
        out_flat = _lookup_onehot(flat_ids, embedding_matrix,
                                  tokens_per_tile, n_tiles, vmem_limit)
    elif path == "resident":
        out_flat = _lookup_resident(flat_ids, embedding_matrix,
                                    tokens_per_tile, n_tiles, group, vmem_limit)
    elif path == "hbm":
        out_flat = _lookup_hbm_gather(flat_ids, embedding_matrix,
                                      tokens_per_tile, n_tiles, vmem_limit)
    else:
        raise ValueError(f"unknown path {path!r}")

    return out_flat[:n_tokens].reshape(*orig_shape, emb_dim)


def init_embedding(key, num_embeddings: int, embedding_dim: int,
                   dtype=jnp.float32) -> jax.Array:
    # Matches nn.init.trunc_normal_(mean=0, std=1, a=-3, b=3).
    return jax.random.truncated_normal(
        key, lower=-3.0, upper=3.0, shape=(num_embeddings, embedding_dim)
    ).astype(dtype)


if __name__ == "__main__":
    num_embeddings = 64
    embedding_dim = 128
    batch, seq = 2, 8

    key = jax.random.PRNGKey(0)
    k_emb, k_ids = jax.random.split(key)

    embedding_matrix = init_embedding(k_emb, num_embeddings, embedding_dim)
    token_ids = jax.random.randint(
        k_ids, shape=(batch, seq), minval=0, maxval=num_embeddings,
        dtype=jnp.int32)

    ref = jnp.take(embedding_matrix, token_ids, axis=0)

    # Default path for a tiny vocab: one-hot MXU gather.
    out_onehot = jax.block_until_ready(
        embedding_lookup(token_ids, embedding_matrix))
    assert out_onehot.shape == (batch, seq, embedding_dim), out_onehot.shape
    assert out_onehot.dtype == embedding_matrix.dtype
    # Tolerant compare: f32 MXU passes may round through bf16 at default
    # precision; row selection errors would be O(1), far above this tolerance.
    np.testing.assert_allclose(np.asarray(out_onehot), np.asarray(ref),
                               rtol=5e-3, atol=5e-3)

    # Resident grouped-gather path (forced): exact copy of table rows.
    out_res = jax.block_until_ready(
        embedding_lookup(token_ids, embedding_matrix, force_path="resident"))
    assert jnp.array_equal(out_res, ref), "resident path mismatch vs reference"

    # HBM per-row DMA gather path (forced): exact copy of table rows.
    out_hbm = jax.block_until_ready(
        embedding_lookup(token_ids, embedding_matrix, force_path="hbm"))
    assert jnp.array_equal(out_hbm, ref), "HBM-gather path mismatch vs reference"

    print("KERNEL_OK")
</pallas_src>

<mosaic_0001>
module attributes {stable_mosaic.version = 11 : i64} {
  func.func @_onehot_kernel(%arg0: i32, %arg1: memref<16x1xi32, #tpu.memory_space<vmem>>, %arg2: memref<64x128xf32, #tpu.memory_space<vmem>>, %arg3: memref<16x128xf32, #tpu.memory_space<vmem>>) attributes {dimension_semantics = [#tpu.dimension_semantics<parallel>], iteration_bounds = array<i64: 1>, scalar_prefetch = 0 : i64, scratch_operands = 0 : i64, tpu.core_type = #tpu.core_type<tc>, window_params = [{transform_indices = @transform_0, window_bounds = array<i64: 16, 1>}, {pipeline_mode = #tpu.pipeline_mode<synchronous>, transform_indices = @transform_1, window_bounds = array<i64: 64, 128>}, {transform_indices = @transform_2, window_bounds = array<i64: 16, 128>}]} {
    %c0 = arith.constant 0 : index
    %c0_0 = arith.constant 0 : index
    %0 = vector.load %arg1[%c0, %c0_0] : memref<16x1xi32, #tpu.memory_space<vmem>>, vector<16x1xi32>
    %1 = tpu.iota {dimensions = array<i32: 1>} : vector<16x64xi32>
    %2 = vector.broadcast %0 : vector<16x1xi32> to vector<16x64xi32>
    %3 = arith.cmpi eq, %2, %1 : vector<16x64xi32>
    %4 = arith.extui %3 : vector<16x64xi1> to vector<16x64xi32>
    %5 = arith.sitofp %4 : vector<16x64xi32> to vector<16x64xf32>
    %c0_1 = arith.constant 0 : index
    %c0_2 = arith.constant 0 : index
    %6 = vector.load %arg2[%c0_1, %c0_2] : memref<64x128xf32, #tpu.memory_space<vmem>>, vector<64x128xf32>
    %cst = arith.constant dense<0.000000e+00> : vector<16x128xf32>
    %7 = tpu.matmul %5, %6, %cst {dimension_numbers = #tpu.dot_dimension_numbers<[1], [0], [0], [1], [0, 0, 1, 1], [], []>} : vector<16x64xf32>, vector<64x128xf32>, vector<16x128xf32> -> vector<16x128xf32>
    %c0_3 = arith.constant 0 : index
    %c0_4 = arith.constant 0 : index
    %8 = vector.load %arg3[%c0_3, %c0_4] : memref<16x128xf32, #tpu.memory_space<vmem>>, vector<16x128xf32>
    tpu.vector_store %arg3[%c0_3, %c0_4], %7 {strides = array<i32>} : memref<16x128xf32, #tpu.memory_space<vmem>>, vector<16x128xf32>,
    return
  }
  func.func @transform_0(%arg0: i32) -> (i32, i32) {
    %c0_i32 = arith.constant 0 : i32
    %c0_i32_0 = arith.constant 0 : i32
    return %arg0, %c0_i32 : i32, i32
  }
  func.func @transform_1(%arg0: i32) -> (i32, i32) {
    %c0_i32 = arith.constant 0 : i32
    %c0_i32_0 = arith.constant 0 : i32
    %c0_i32_1 = arith.constant 0 : i32
    return %c0_i32, %c0_i32_0 : i32, i32
  }
  func.func @transform_2(%arg0: i32) -> (i32, i32) {
    %c0_i32 = arith.constant 0 : i32
    %c0_i32_0 = arith.constant 0 : i32
    return %arg0, %c0_i32 : i32, i32
  }
}

</mosaic_0001>

<llo_original>
// kernel: tpu_custom_call.1
$region0: #{tpu_custom_call.1}
  #allocation0 [shape = 'u32[]', space=smem, size = 0x4, offset = 0x4, fixed_abs, tag = 'smem constant byte address 0x4 - core index']
  #allocation1 [shape = 'u32[144,128]{1,0:T(1,128)}', space=vmem, size = 0x12000, scoped, tag = 'internal scratch']
  %s0 = inlined_call_operand.vmem [shape: s32[16,1], index: 0, kind: input, shape index: {}]
  %s1 = inlined_call_operand.hbm [shape: f32[64,128], index: 1, kind: input, shape index: {}]
  %s2 = inlined_call_operand.hbm [shape: f32[16,128], index: 2, kind: output, shape index: {}]
  %s3 = sld [smem:[#allocation0]]
  $region22: #{tpu_custom_call.1} parent=0
    _
  %s5 = ssub.s32 1, %s3
  %s6 = scalar_select 0, %s5, %s3
  $region1: #{tpu_custom_call.1} parent=0
    #allocation2 [shape = 'u8[32768]{0}', space=vmem, size = 0x8000, scoped, tag = 'input window, operand 1, single buffered']
    #allocation3 [shape = 's32[1]{0}', space=sflag, size = 0x4, scoped, tag = 'scoped memory for tpu_custom_call.1']
    #allocation4 [shape = 's32[1]{0}', space=sflag, size = 0x4, scoped, tag = 'scoped memory for tpu_custom_call.1']
    #allocation5 [shape = 'u8[8192]{0}', space=vmem, size = 0x2000, scoped, tag = 'output window, operand 0, single buffered']
    %7 = vsyncpa [#allocation3], 0
    %8 = vsyncpa [#allocation4], 0
    // Predicated region
    $region2: #{tpu_custom_call.1} parent=1 // pred_check
      _
    $region3: #{tpu_custom_call.1} parent=1 // pred_check_branch
      %10 = sbr.rel (0) target = $region5
    $region4: #{tpu_custom_call.1} parent=1 // pred_region
      _
    $region5: #{tpu_custom_call.1} parent=1 // pred_fallthru
      _
    // Predicated region
    $region6: #{tpu_custom_call.1} parent=1 // pred_check
      _
    $region7: #{tpu_custom_call.1} parent=1 // pred_check_branch
      %12 = sbr.rel (0) target = $region9
    $region8: #{tpu_custom_call.1} parent=1 // pred_region
      %s14 = ssub.s32 1024, 1024
      %15 = vsyncadd [#allocation3], %s14
      %s16 = sshll.u32 [#allocation2], 4
      %s17 = int_to_ptr.vmem [resolvable:$true] %s16
      %22 = dma.hbm_to_vmem [thread:$0]  %s1, 1024, %s17, [#allocation3], 128, 128, 8
    $region9: #{tpu_custom_call.1} parent=1 // pred_fallthru
      _
    // Predicated region
    $region10: #{tpu_custom_call.1} parent=1 // pred_check
      _
    $region11: #{tpu_custom_call.1} parent=1 // pred_check_branch
      %24 = sbr.rel (0) target = $region13
    $region12: #{tpu_custom_call.1} parent=1 // pred_region
      %25 = dma.done [#allocation3], 1024
    $region13: #{tpu_custom_call.1} parent=1 // pred_fallthru
      _
    %v26 = vld [vmem:[%s0] sm:$0xff]
    %v27 = vld [vmem:[%s0 + $0x8] sm:$0xff]
    %v28 = vlaneseq
    %v29 = vand.u32 %v28, 127
    %30 = vset.pattern.permute.xlu0 0
    %31 = vperm.xlu0 %30, %v26
    %v32 = vpop.permute.xlu0 %31
    %33 = vset.pattern.permute.xlu0 0
    %34 = vperm.xlu0 %33, %v27
    %v35 = vpop.permute.xlu0 %34
    %vm36 = vcmp.eq.s32.totalorder %v32, %v29
    %vm37 = vcmp.eq.s32.totalorder %v35, %v29
    %v38 = vsel %vm36, 1, 0
    %v39 = vsel %vm37, 1, 0
    %v40 = vcvt.s32.f32 %v38
    %v41 = vcvt.s32.f32 %v39
    %v42 = vld [vmem:[#allocation2] sm:$0xff]
    %v43 = vld [vmem:[#allocation2 + $0x8] sm:$0xff]
    %v44 = vld [vmem:[#allocation2 + $0x10] sm:$0xff]
    %v45 = vld [vmem:[#allocation2 + $0x18] sm:$0xff]
    %v46 = vld [vmem:[#allocation2 + $0x20] sm:$0xff]
    %v47 = vld [vmem:[#allocation2 + $0x28] sm:$0xff]
    %v48 = vld [vmem:[#allocation2 + $0x30] sm:$0xff]
    %v49 = vld [vmem:[#allocation2 + $0x38] sm:$0xff]
    %vm50 = vcmask 523264
    %v52 = vsel %vm50, %v40, 0
    %v55 = vsel %vm50, %v41, 0
    %57 = vmatprep.subr.mxu0 0.0
    %58 = vmatpush1.msra.mxu0 %v42
    %59 = vmatprep.subr.mxu0 0.0
    %60 = vmatpush1.msra.mxu0 %v43
    %61 = vmatprep.subr.mxu0 0.0
    %62 = vmatpush1.msra.mxu0 %v44
    %63 = vmatprep.subr.mxu0 0.0
    %64 = vmatpush1.msra.mxu0 %v45
    %65 = vmatprep.subr.mxu0 0.0
    %66 = vmatpush1.msra.mxu0 %v46
    %67 = vmatprep.subr.mxu0 0.0
    %68 = vmatpush1.msra.mxu0 %v47
    %69 = vmatprep.subr.mxu0 0.0
    %70 = vmatpush1.msra.mxu0 %v48
    %71 = vmatprep.subr.mxu0 0.0
    %72 = vmatpush1.msra.mxu0 %v49
    %73 = vmatprep.subr.mxu0 0.0
    %74 = vmatpush1.msra.mxu0 0.0
    %75 = vmatprep.subr.mxu0 0.0
    %76 = vmatpush1.msra.mxu0 0.0
    %77 = vmatprep.subr.mxu0 0.0
    %78 = vmatpush1.msra.mxu0 0.0
    %79 = vmatprep.subr.mxu0 0.0
    %80 = vmatpush1.msra.mxu0 0.0
    %81 = vmatprep.subr.mxu0 0.0
    %82 = vmatpush1.msra.mxu0 0.0
    %83 = vmatprep.subr.mxu0 0.0
    %84 = vmatpush1.msra.mxu0 0.0
    %85 = vmatprep.subr.mxu0 0.0
    %86 = vmatpush1.msra.mxu0 0.0
    %87 = vmatprep.subr.mxu0 0.0
    %88 = vmatpush1.msra.mxu0 0.0
    %89 = vmatprep.subr.mxu0 0.0
    %90 = vmatpush1.msra.mxu0 0.0
    %91 = vmatprep.subr.mxu0 0.0
    %92 = vmatpush1.msra.mxu0 0.0
    %93 = vmatprep.subr.mxu0 0.0
    %94 = vmatpush1.msra.mxu0 0.0
    %95 = vmatprep.subr.mxu0 0.0
    %96 = vmatpush1.msra.mxu0 0.0
    %97 = vmatprep.subr.mxu0 0.0
    %98 = vmatpush1.msra.mxu0 0.0
    %99 = vmatprep.subr.mxu0 0.0
    %100 = vmatpush1.msra.mxu0 0.0
    %101 = vmatprep.subr.mxu0 0.0
    %102 = vmatpush1.msra.mxu0 0.0
    %103 = vmatprep.subr.mxu0 0.0
    %104 = vmatpush1.msra.mxu0 0.0
    %105 = vmatprep.subr.mxu0 0.0
    %106 = vmatpush1.msra.mxu0 0.0
    %107 = vmatprep.subr.mxu0 0.0
    %108 = vmatpush1.msra.mxu0 0.0
    %109 = vmatprep.subr.mxu0 0.0
    %110 = vmatpush1.msra.mxu0 0.0
    %111 = vmatprep.subr.mxu0 0.0
    %112 = vmatpush1.msra.mxu0 0.0
    %113 = vmatprep.subr.mxu0 0.0
    %114 = vmatpush1.msra.mxu0 0.0
    %115 = vmatprep.subr.mxu0 0.0
    %116 = vmatpush1.msra.mxu0 0.0
    %117 = vmatprep.subr.mxu0 0.0
    %118 = vmatpush1.msra.mxu0 0.0
    %119 = vmatprep.subr.mxu0 0.0
    %120 = vmatpush1.msra.mxu0 0.0
    %121 = vmatprep.mubr.f32.mxu0 0.0
    %122 = vmatmul.mubr.f32.gmra.mrb[0].mxu0 %v52
    %v123 = vpop.f32.mrb[0].mxu0
    %v124 = vadd.f32 0.0, %v123
    %v125 = vpop.f32.mrb[0].mxu0
    %126 = vmatprep.mubr.f32.mxu0 0.0
    %127 = vmatmul.mubr.f32.gmra.mrb[0].mxu0 %v55
    %v128 = vpop.f32.mrb[0].mxu0
    %v129 = vadd.f32 0.0, %v128
    %v130 = vpop.f32.mrb[0].mxu0
    %131 = vdwg.mxu0
    %132 = vst [vmem:[#allocation5] sm:$0xff] %v124
    %133 = vst [vmem:[#allocation5 + $0x8] sm:$0xff] %v129
    // Predicated region
    $region14: #{tpu_custom_call.1} parent=1 // pred_check
      _
    $region15: #{tpu_custom_call.1} parent=1 // pred_check_branch
      %135 = sbr.rel (0) target = $region17
    $region16: #{tpu_custom_call.1} parent=1 // pred_region
      %s137 = ssub.s32 256, 256
      %138 = vsyncadd [#allocation4], %s137
      %s139 = sshll.u32 [#allocation5], 4
      %s140 = int_to_ptr.vmem [resolvable:$true] %s139
      %145 = dma.vmem_to_hbm [thread:$0]  %s140, 256, %s2, [#allocation4], 128, 128, 8
    $region17: #{tpu_custom_call.1} parent=1 // pred_fallthru
      _
    // Predicated region
    $region18: #{tpu_custom_call.1} parent=1 // pred_check
      _
    $region19: #{tpu_custom_call.1} parent=1 // pred_check_branch
      %147 = sbr.rel (0) target = $region21
    $region20: #{tpu_custom_call.1} parent=1 // pred_region
      %148 = dma.done [#allocation4], 256
    $region21: #{tpu_custom_call.1} parent=1 // pred_fallthru
      _
    %149 = vsyncpa [#allocation3], 1
    %150 = vsyncpa [#allocation4], 1

</llo_original>
